<compile_context>
chip_gen: v6e
topology: v6e:2x2x1
jax: 0.10.0
libtpu: 0.0.40
codegen_flags: <defaults>
</compile_context>

<pallas_src>
import jax
import jax.numpy as jnp
from jax.experimental import pallas as pl
from jax.experimental.pallas import tpu as pltpu


def _round_up(a: int, b: int) -> int:
    return (a + b - 1) // b * b


def _instance_norm_kernel(x_ref, xn_ref, mean_ref, std_ref):
    # x_ref: (TR, F) tile; each row is one (batch, channel) instance.
    x = x_ref[...].astype(jnp.float32)
    f = x.shape[-1]

    mean = jnp.sum(x, axis=-1, keepdims=True) * jnp.float32(1.0 / f)   # (TR, 1)
    diff = x - mean
    # torch.var default is unbiased (correction=1): divide by F-1.
    var = jnp.sum(diff * diff, axis=-1, keepdims=True) / jnp.float32(f - 1)
    var_eps = var + jnp.float32(1e-5)

    inv_std = jax.lax.rsqrt(var_eps)            # EUP rsqrt -> free-ish slot
    xn_ref[...] = (diff * inv_std).astype(xn_ref.dtype)   # lane-dense main store
    mean_ref[...] = mean
    std_ref[...] = jnp.sqrt(var_eps)


def instance_norm(x: jax.Array):
    """Pallas implementation of the reference InstanceNorm.forward.

    Args:
      x: (batch, channel, feature)

    Returns:
      (x_norm, mean, std) with shapes (B, C, F), (B, C, 1), (B, C, 1)
    """
    b, c, f = x.shape
    r = b * c
    x2 = x.reshape(r, f)
    itemsize = jnp.dtype(x.dtype).itemsize

    # --- Row-tile sizing, generation-agnostic (conservative for v5e/v7x) ---
    # Per row in VMEM: double-buffered input + output tiles (2*2*F*itemsize)
    # plus ~3 live f32 temporaries (x_f32, diff, xn) inside the body.
    vmem_budget = 8 * 1024 * 1024
    bytes_per_row = f * (4 * itemsize + 3 * 4)
    tr = max(8, min(512, vmem_budget // max(bytes_per_row, 1)))
    tr = (tr // 8) * 8
    tr = min(tr, _round_up(r, 8))          # don't tile past the (padded) rows
    r_pad = _round_up(r, tr)
    num_tiles = r_pad // tr
    # TODO(synk): extremely large F (a single 8-row tile > VMEM) would need a
    # two-pass F-split reduction; not needed for typical instance-norm shapes.

    if r_pad != r:
        # Padded rows are all-zero: var=0 -> std=sqrt(1e-5) (no NaN); sliced off below.
        x2 = jnp.pad(x2, ((0, r_pad - r), (0, 0)))

    grid_spec = pltpu.PrefetchScalarGridSpec(
        num_scalar_prefetch=0,
        grid=(num_tiles,),
        in_specs=[
            pl.BlockSpec((tr, f), lambda i: (i, 0)),
        ],
        out_specs=[
            pl.BlockSpec((tr, f), lambda i: (i, 0)),
            pl.BlockSpec((tr, 1), lambda i: (i, 0)),
            pl.BlockSpec((tr, 1), lambda i: (i, 0)),
        ],
    )

    out_shapes = (
        jax.ShapeDtypeStruct((r_pad, f), x.dtype),
        jax.ShapeDtypeStruct((r_pad, 1), jnp.float32),   # keep stats in f32
        jax.ShapeDtypeStruct((r_pad, 1), jnp.float32),
    )

    cost = pl.CostEstimate(
        flops=5 * r * f,
        transcendentals=2 * r,
        bytes_accessed=2 * r * f * itemsize + 2 * r * 4,
    )

    xn, mean, std = pl.pallas_call(
        _instance_norm_kernel,
        out_shape=out_shapes,
        grid_spec=grid_spec,
        compiler_params=pltpu.CompilerParams(
            dimension_semantics=("parallel",),
            vmem_limit_bytes=32 * 1024 * 1024,
        ),
        cost_estimate=cost,
    )(x2)

    xn = xn[:r].reshape(b, c, f)
    # Match the PyTorch module's output dtype (stats were computed in f32).
    mean = mean[:r].reshape(b, c, 1).astype(x.dtype)
    std = std[:r].reshape(b, c, 1).astype(x.dtype)
    return xn, mean, std


def _reference(x):
    # Pure-JAX reference matching the PyTorch module exactly.
    b, c = x.shape[0], x.shape[1]
    xr = x.reshape(b, c, -1)
    mean = jnp.mean(xr, axis=-1)
    var = jnp.var(xr, axis=-1, ddof=1)   # unbiased, like torch.var default
    std = jnp.sqrt(var + 1e-5)
    mean = mean.reshape(b, c, 1)
    std = std.reshape(b, c, 1)
    return (x - mean) / std, mean, std


if __name__ == "__main__":
    key = jax.random.PRNGKey(0)
    # Small shapes consistent with (batch, channel, feature).
    B, C, F = 2, 4, 32
    x = jax.random.normal(key, (B, C, F), dtype=jnp.float32)

    xn, mean, std = instance_norm(x)
    jax.block_until_ready((xn, mean, std))

    xn_ref, mean_ref, std_ref = _reference(x)
    assert jnp.allclose(xn, xn_ref, atol=1e-5, rtol=1e-5)
    assert jnp.allclose(mean, mean_ref, atol=1e-5, rtol=1e-5)
    assert jnp.allclose(std, std_ref, atol=1e-5, rtol=1e-5)

    print("KERNEL_OK")
</pallas_src>

<mosaic_0001>
module attributes {stable_mosaic.version = 11 : i64} {
  func.func @_instance_norm_kernel(%arg0: i32, %arg1: memref<8x32xf32, #tpu.memory_space<vmem>>, %arg2: memref<8x32xf32, #tpu.memory_space<vmem>>, %arg3: memref<8x1xf32, #tpu.memory_space<vmem>>, %arg4: memref<8x1xf32, #tpu.memory_space<vmem>>) attributes {dimension_semantics = [#tpu.dimension_semantics<parallel>], iteration_bounds = array<i64: 1>, scalar_prefetch = 0 : i64, scratch_operands = 0 : i64, tpu.core_type = #tpu.core_type<tc>, window_params = [{transform_indices = @transform_0, window_bounds = array<i64: 8, 32>}, {transform_indices = @transform_1, window_bounds = array<i64: 8, 32>}, {transform_indices = @transform_2, window_bounds = array<i64: 8, 1>}, {transform_indices = @transform_3, window_bounds = array<i64: 8, 1>}]} {
    %c0 = arith.constant 0 : index
    %c0_0 = arith.constant 0 : index
    %0 = vector.load %arg1[%c0, %c0_0] : memref<8x32xf32, #tpu.memory_space<vmem>>, vector<8x32xf32>
    %cst = arith.constant dense<0.000000e+00> : vector<8xf32>
    %1 = vector.multi_reduction <add>, %0, %cst [1] : vector<8x32xf32> to vector<8xf32>
    %2 = vector.shape_cast %1 : vector<8xf32> to vector<8x1xf32>
    %cst_1 = arith.constant 3.125000e-02 : f32
    %3 = vector.broadcast %cst_1 : f32 to vector<8x1xf32>
    %4 = arith.mulf %2, %3 : vector<8x1xf32>
    %5 = vector.broadcast %4 : vector<8x1xf32> to vector<8x32xf32>
    %6 = arith.subf %0, %5 : vector<8x32xf32>
    %7 = arith.mulf %6, %6 : vector<8x32xf32>
    %cst_2 = arith.constant dense<0.000000e+00> : vector<8xf32>
    %8 = vector.multi_reduction <add>, %7, %cst_2 [1] : vector<8x32xf32> to vector<8xf32>
    %9 = vector.shape_cast %8 : vector<8xf32> to vector<8x1xf32>
    %cst_3 = arith.constant 3.100000e+01 : f32
    %10 = vector.broadcast %cst_3 : f32 to vector<8x1xf32>
    %11 = arith.divf %9, %10 : vector<8x1xf32>
    %cst_4 = arith.constant 9.99999974E-6 : f32
    %12 = vector.broadcast %cst_4 : f32 to vector<8x1xf32>
    %13 = arith.addf %11, %12 : vector<8x1xf32>
    %14 = math.rsqrt %13 : vector<8x1xf32>
    %15 = vector.broadcast %14 : vector<8x1xf32> to vector<8x32xf32>
    %16 = arith.mulf %6, %15 : vector<8x32xf32>
    %c0_5 = arith.constant 0 : index
    %c0_6 = arith.constant 0 : index
    %17 = vector.load %arg2[%c0_5, %c0_6] : memref<8x32xf32, #tpu.memory_space<vmem>>, vector<8x32xf32>
    tpu.vector_store %arg2[%c0_5, %c0_6], %16 {strides = array<i32>} : memref<8x32xf32, #tpu.memory_space<vmem>>, vector<8x32xf32>,
    %c0_7 = arith.constant 0 : index
    %c0_8 = arith.constant 0 : index
    %18 = vector.load %arg3[%c0_7, %c0_8] : memref<8x1xf32, #tpu.memory_space<vmem>>, vector<8x1xf32>
    tpu.vector_store %arg3[%c0_7, %c0_8], %4 {strides = array<i32>} : memref<8x1xf32, #tpu.memory_space<vmem>>, vector<8x1xf32>,
    %19 = math.sqrt %13 : vector<8x1xf32>
    %c0_9 = arith.constant 0 : index
    %c0_10 = arith.constant 0 : index
    %20 = vector.load %arg4[%c0_9, %c0_10] : memref<8x1xf32, #tpu.memory_space<vmem>>, vector<8x1xf32>
    tpu.vector_store %arg4[%c0_9, %c0_10], %19 {strides = array<i32>} : memref<8x1xf32, #tpu.memory_space<vmem>>, vector<8x1xf32>,
    return
  }
  func.func @transform_0(%arg0: i32) -> (i32, i32) {
    %c0_i32 = arith.constant 0 : i32
    %c0_i32_0 = arith.constant 0 : i32
    return %arg0, %c0_i32 : i32, i32
  }
  func.func @transform_1(%arg0: i32) -> (i32, i32) {
    %c0_i32 = arith.constant 0 : i32
    %c0_i32_0 = arith.constant 0 : i32
    return %arg0, %c0_i32 : i32, i32
  }
  func.func @transform_2(%arg0: i32) -> (i32, i32) {
    %c0_i32 = arith.constant 0 : i32
    %c0_i32_0 = arith.constant 0 : i32
    return %arg0, %c0_i32 : i32, i32
  }
  func.func @transform_3(%arg0: i32) -> (i32, i32) {
    %c0_i32 = arith.constant 0 : i32
    %c0_i32_0 = arith.constant 0 : i32
    return %arg0, %c0_i32 : i32, i32
  }
}

</mosaic_0001>

<llo_original>
// kernel: tpu_custom_call.1
$region0: #{tpu_custom_call.1}
  #allocation0 [shape = 'u32[]', space=smem, size = 0x4, offset = 0x4, fixed_abs, tag = 'smem constant byte address 0x4 - core index']
  #allocation1 [shape = 'u32[144,128]{1,0:T(1,128)}', space=vmem, size = 0x12000, scoped, tag = 'internal scratch']
  %s0 = inlined_call_operand.hbm [shape: f32[8,32], index: 0, kind: input, shape index: {}]
  %s1 = inlined_call_operand.hbm [shape: f32[8,32], index: 1, kind: output, shape index: {0}]
  %s2 = inlined_call_operand.vmem [shape: f32[8,1], index: 2, kind: output, shape index: {1}]
  %s3 = inlined_call_operand.vmem [shape: f32[8,1], index: 3, kind: output, shape index: {2}]
  %4 = xla_tuple %s1, %s2, %s3
  %s5 = sld [smem:[#allocation0]]
  $region34: #{tpu_custom_call.1} parent=0
    _
  %s7 = ssub.s32 1, %s5
  %s8 = scalar_select 0, %s7, %s5
  $region1: #{tpu_custom_call.1} parent=0
    #allocation2 [shape = 'u8[4096]{0}', space=vmem, size = 0x1000, scoped, tag = 'input window, operand 0, single buffered']
    #allocation3 [shape = 's32[1]{0}', space=sflag, size = 0x4, scoped, tag = 'scoped memory for tpu_custom_call.1']
    #allocation4 [shape = 's32[1]{0}', space=sflag, size = 0x4, scoped, tag = 'scoped memory for tpu_custom_call.1']
    #allocation5 [shape = 'u8[4096]{0}', space=vmem, size = 0x1000, scoped, tag = 'output window, operand 0, single buffered']
    %9 = vsyncpa [#allocation3], 0
    %10 = vsyncpa [#allocation4], 0
    // Predicated region
    $region2: #{tpu_custom_call.1} parent=1 // pred_check
      _
    $region3: #{tpu_custom_call.1} parent=1 // pred_check_branch
      %12 = sbr.rel (0) target = $region5
    $region4: #{tpu_custom_call.1} parent=1 // pred_region
      %s14 = ssub.s32 128, 128
      %15 = vsyncadd [#allocation3], %s14
      %s17 = sshll.u32 [#allocation2], 4
      %s18 = int_to_ptr.vmem [resolvable:$true] %s17
      %20 = dma.hbm_to_vmem [thread:$0]  %s0, 128, %s18, [#allocation3]
    $region5: #{tpu_custom_call.1} parent=1 // pred_fallthru
      _
    // Predicated region
    $region6: #{tpu_custom_call.1} parent=1 // pred_check
      _
    $region7: #{tpu_custom_call.1} parent=1 // pred_check_branch
      %22 = sbr.rel (0) target = $region9
    $region8: #{tpu_custom_call.1} parent=1 // pred_region
      %23 = dma.done [#allocation3], 128
    $region9: #{tpu_custom_call.1} parent=1 // pred_fallthru
      _
    %v24 = vld [vmem:[#allocation2] sm:$0xff]
    %vm25 = vcmask 261120
    %v26 = vsel %vm25, %v24, 0.0
    %27 = vadd.xlane.f32.xlu0 %v26
    %v28 = vpop.xlane.xlu0 %27
    %v29 = vmul.f32 %v28, 0.03125
    %v30 = vsub.f32 %v24, %v29
    %v31 = vmul.f32 %v30, %v30
    %v32 = vsel %vm25, %v31, 0.0
    %33 = vadd.xlane.f32.xlu0 %v32
    %v34 = vpop.xlane.xlu0 %33
    %v35 = vrcp.pop 31.0
    %v36 = vmul.f32 %v34, %v35
    %v37 = vadd.f32 %v36, 1e-05
    %v38 = vrsqrt.pop %v37
    %v39 = vmul.f32 %v30, %v38
    %40 = vst.msk [vmem:[#allocation5] sm:$0xff] %vm25, %v39
    %vm41 = vcmask 7168
    %42 = vst.msk [vmem:[%s2] sm:$0xff] %vm41, %v29
    %v43 = vrsqrt.pop %v37
    %v44 = vmul.f32 %v37, %v43
    %vm45 = vcmp.eq.f32.partialorder %v37, inf
    %v46 = vsel %vm45, %v37, %v44
    %vm47 = vcmp.eq.f32.partialorder %v37, 0.0
    %v48 = vand.u32 %v37, 2147483648
    %v49 = vsel %vm47, %v48, %v46
    %50 = vst.msk [vmem:[%s3] sm:$0xff] %vm41, %v49
    // Predicated region
    $region10: #{tpu_custom_call.1} parent=1 // pred_check
      _
    $region11: #{tpu_custom_call.1} parent=1 // pred_check_branch
      %52 = sbr.rel (0) target = $region13
    $region12: #{tpu_custom_call.1} parent=1 // pred_region
      %s54 = ssub.s32 128, 128
      %55 = vsyncadd [#allocation4], %s54
      %s57 = sshll.u32 [#allocation5], 4
      %s58 = int_to_ptr.vmem [resolvable:$true] %s57
      %60 = dma.vmem_to_hbm [thread:$0]  %s58, 128, %s1, [#allocation4]
    $region13: #{tpu_custom_call.1} parent=1 // pred_fallthru
      _
    // Predicated region
    $region14: #{tpu_custom_call.1} parent=1 // pred_check
      _
    $region15: #{tpu_custom_call.1} parent=1 // pred_check_branch
      %62 = sbr.rel (0) target = $region17
    $region16: #{tpu_custom_call.1} parent=1 // pred_region
      _
    $region17: #{tpu_custom_call.1} parent=1 // pred_fallthru
      _
    // Predicated region
    $region18: #{tpu_custom_call.1} parent=1 // pred_check
      _
    $region19: #{tpu_custom_call.1} parent=1 // pred_check_branch
      %64 = sbr.rel (0) target = $region21
    $region20: #{tpu_custom_call.1} parent=1 // pred_region
      _
    $region21: #{tpu_custom_call.1} parent=1 // pred_fallthru
      _
    // Predicated region
    $region22: #{tpu_custom_call.1} parent=1 // pred_check
      _
    $region23: #{tpu_custom_call.1} parent=1 // pred_check_branch
      %66 = sbr.rel (0) target = $region25
    $region24: #{tpu_custom_call.1} parent=1 // pred_region
      %67 = dma.done [#allocation4], 128
    $region25: #{tpu_custom_call.1} parent=1 // pred_fallthru
      _
    // Predicated region
    $region26: #{tpu_custom_call.1} parent=1 // pred_check
      _
    $region27: #{tpu_custom_call.1} parent=1 // pred_check_branch
      %69 = sbr.rel (0) target = $region29
    $region28: #{tpu_custom_call.1} parent=1 // pred_region
      _
    $region29: #{tpu_custom_call.1} parent=1 // pred_fallthru
      _
    // Predicated region
    $region30: #{tpu_custom_call.1} parent=1 // pred_check
      _
    $region31: #{tpu_custom_call.1} parent=1 // pred_check_branch
      %71 = sbr.rel (0) target = $region33
    $region32: #{tpu_custom_call.1} parent=1 // pred_region
      _
    $region33: #{tpu_custom_call.1} parent=1 // pred_fallthru
      _
    %72 = vsyncpa [#allocation3], 1
    %73 = vsyncpa [#allocation4], 1

</llo_original>
